<compile_context>
chip_gen: v5e
topology: v5e:2x2
jax: 0.10.0
libtpu: 0.0.40
codegen_flags: <defaults>
</compile_context>

<pallas_src>
import functools

import jax
import jax.numpy as jnp
from jax.experimental import pallas as pl
from jax.experimental.pallas import tpu as pltpu

LANES = 128
TILE_ROWS_MAX = 2048        # up to 2048*128*4B = 1 MiB per input block (f32)
NUM_CORES = 2               # leading "parallel" grid axis (helps v7x megacore)
ACC_SUBLANES = 8            # (8, 128) f32 vreg-shaped partial accumulator


def _sublane_multiple(dtype):
    # f32 -> 8, bf16/f16 -> 16, int8/fp8 -> 32 (second-to-last block dim req.)
    return max(8, 32 // jnp.dtype(dtype).itemsize)


def _dist_partial_kernel(x_ref, y_ref, o_ref, *, p, rows_total, tile_rows,
                         tiles_per_core):
    """Accumulates per-core sum(|x-y|^p) into a resident (1, 8, 128) block."""
    j = pl.program_id(0)            # core axis ("parallel")
    i = pl.program_id(1)            # tile axis ("arbitrary" reduction)

    @pl.when(i == 0)
    def _():
        o_ref[...] = jnp.zeros_like(o_ref)

    # Logical (unclamped) tile index.  The index_map clamps the DMA in-bounds;
    # here we mask away rows at/after rows_total (ragged-tail garbage and any
    # duplicated clamped tiles) before accumulating.
    tile_idx = j * tiles_per_core + i
    row_start = tile_idx * tile_rows
    row_ids = jax.lax.broadcasted_iota(jnp.int32, (tile_rows, 1), 0)
    valid = (row_ids + row_start) < rows_total

    d = x_ref[...].astype(jnp.float32) - y_ref[...].astype(jnp.float32)
    work = jnp.abs(d) if p == 1 else d * d
    work = jnp.where(valid, work, 0.0)

    # (tile_rows,128) -> (tile_rows//8, 8, 128) -> pure vreg-wise VPU adds.
    part = work.reshape(tile_rows // ACC_SUBLANES, ACC_SUBLANES, LANES).sum(axis=0)
    o_ref[...] += part[None, :, :]


def _dist_sum_pallas(x2d, y2d, p):
    rows = x2d.shape[0]
    sub = max(_sublane_multiple(x2d.dtype), _sublane_multiple(y2d.dtype))
    tile_rows = min(TILE_ROWS_MAX, (rows // sub) * sub)
    n_tiles = pl.cdiv(rows, tile_rows)
    tiles_per_core = pl.cdiv(n_tiles, NUM_CORES)

    def in_map(j, i):
        # Clamp so the DMA never indexes past the last tile; the kernel's row
        # mask zeroes any duplicated / out-of-range contributions.
        return (jnp.minimum(j * tiles_per_core + i, n_tiles - 1), 0)

    kernel = functools.partial(
        _dist_partial_kernel, p=p, rows_total=rows, tile_rows=tile_rows,
        tiles_per_core=tiles_per_core)

    in_bytes = (x2d.size * jnp.dtype(x2d.dtype).itemsize
                + y2d.size * jnp.dtype(y2d.dtype).itemsize)
    cost = pl.CostEstimate(
        flops=3 * x2d.size,
        transcendentals=0,
        bytes_accessed=in_bytes + NUM_CORES * ACC_SUBLANES * LANES * 4)

    partials = pl.pallas_call(
        kernel,
        out_shape=jax.ShapeDtypeStruct((NUM_CORES, ACC_SUBLANES, LANES),
                                       jnp.float32),
        grid_spec=pltpu.PrefetchScalarGridSpec(
            num_scalar_prefetch=0,
            grid=(NUM_CORES, tiles_per_core),
            in_specs=[
                pl.BlockSpec((tile_rows, LANES), in_map),
                pl.BlockSpec((tile_rows, LANES), in_map),
            ],
            out_specs=pl.BlockSpec((1, ACC_SUBLANES, LANES),
                                   lambda j, i: (j, 0, 0)),
        ),
        compiler_params=pltpu.CompilerParams(
            dimension_semantics=("parallel", "arbitrary")),
        cost_estimate=cost,
    )(x2d, y2d)
    return jnp.sum(partials)


@functools.partial(jax.jit, static_argnames=("dist_metric",))
def reconstruction_loss(reconstruct, gt, dist_metric="L1"):
    """JAX/Pallas equivalent of ReconstructionLoss.forward.

    Returns torch.dist(reconstruct, gt, p) / (b * h * w), with p=1 for 'L1'
    and p=2 otherwise (matches the PyTorch module, incl. dividing by b*h*w).
    """
    p = 1 if dist_metric == "L1" else 2
    b, c, h, w = gt.shape

    x = reconstruct.reshape(-1)
    y = gt.reshape(-1)
    n = x.shape[0]

    sub = max(_sublane_multiple(x.dtype), _sublane_multiple(y.dtype))
    min_elems = sub * LANES
    # Zero-pad (0 contribution to the sum) only in the rare case the element
    # count isn't lane-aligned or the tensor is smaller than one minimal
    # (sub, 128) tile.  Typical image shapes (b*3*224*224) take the copy-free
    # path; the ragged last tile is handled by the in-kernel mask instead.
    if (n % LANES != 0) or (n < min_elems):
        pad = (-n) % min_elems
        if pad:
            x = jnp.pad(x, (0, pad))
            y = jnp.pad(y, (0, pad))

    rows = x.shape[0] // LANES
    x2d = x.reshape(rows, LANES)
    y2d = y.reshape(rows, LANES)

    s = _dist_sum_pallas(x2d, y2d, p)
    if p == 2:
        s = jnp.sqrt(s)
    return s / (b * h * w)


if __name__ == "__main__":
    key = jax.random.PRNGKey(0)
    k1, k2 = jax.random.split(key)

    # Small shapes consistent with the module's (b, 3, H, W) convention.
    b, c, h, w = 2, 3, 16, 16
    reconstruct = jax.random.normal(k1, (b, c, h, w), dtype=jnp.float32)
    gt = jax.random.normal(k2, (b, c, h, w), dtype=jnp.float32)

    loss_l1 = jax.block_until_ready(
        reconstruction_loss(reconstruct, gt, dist_metric="L1"))
    loss_l2 = jax.block_until_ready(
        reconstruction_loss(reconstruct, gt, dist_metric="L2"))

    # Reference check in plain JAX (torch.dist semantics).
    ref_l1 = jnp.sum(jnp.abs(reconstruct - gt)) / (b * h * w)
    ref_l2 = jnp.sqrt(jnp.sum((reconstruct - gt) ** 2)) / (b * h * w)
    assert jnp.allclose(loss_l1, ref_l1, rtol=1e-5, atol=1e-5), (loss_l1, ref_l1)
    assert jnp.allclose(loss_l2, ref_l2, rtol=1e-5, atol=1e-5), (loss_l2, ref_l2)

    print("KERNEL_OK")
</pallas_src>

<mosaic_0001>
module attributes {stable_mosaic.version = 11 : i64} {
  func.func @_dist_partial_kernel(%arg0: i32, %arg1: i32, %arg2: memref<8x128xf32, #tpu.memory_space<vmem>>, %arg3: memref<8x128xf32, #tpu.memory_space<vmem>>, %arg4: memref<1x8x128xf32, #tpu.memory_space<vmem>>) attributes {dimension_semantics = [#tpu.dimension_semantics<parallel>, #tpu.dimension_semantics<arbitrary>], iteration_bounds = array<i64: 2, 1>, scalar_prefetch = 0 : i64, scratch_operands = 0 : i64, tpu.core_type = #tpu.core_type<tc>, window_params = [{transform_indices = @transform_0, window_bounds = array<i64: 8, 128>}, {transform_indices = @transform_1, window_bounds = array<i64: 8, 128>}, {transform_indices = @transform_2, window_bounds = array<i64: 1, 8, 128>}]} {
    %c0_i32 = arith.constant 0 : i32
    %0 = arith.cmpi eq, %arg1, %c0_i32 : i32
    %1 = arith.extui %0 : i1 to i32
    %c0_i32_0 = arith.constant 0 : i32
    %2 = arith.cmpi ne, %1, %c0_i32_0 : i32
    scf.if %2 {
      %cst_11 = arith.constant 0.000000e+00 : f32
      %25 = vector.broadcast %cst_11 : f32 to vector<1x8x128xf32>
      %c0_12 = arith.constant 0 : index
      %c0_13 = arith.constant 0 : index
      %c0_14 = arith.constant 0 : index
      %26 = vector.load %arg4[%c0_12, %c0_13, %c0_14] : memref<1x8x128xf32, #tpu.memory_space<vmem>>, vector<1x8x128xf32>
      tpu.vector_store %arg4[%c0_12, %c0_13, %c0_14], %25 {strides = array<i32>} : memref<1x8x128xf32, #tpu.memory_space<vmem>>, vector<1x8x128xf32>,
    } else {
    }
    %c1_i32 = arith.constant 1 : i32
    %3 = arith.muli %arg0, %c1_i32 : i32
    %4 = arith.addi %3, %arg1 : i32
    %c8_i32 = arith.constant 8 : i32
    %5 = arith.muli %4, %c8_i32 : i32
    %6 = tpu.iota {dimensions = array<i32: 0>} : vector<8x1xi32>
    %7 = vector.broadcast %5 : i32 to vector<8x1xi32>
    %8 = arith.addi %6, %7 : vector<8x1xi32>
    %c12_i32 = arith.constant 12 : i32
    %9 = vector.broadcast %c12_i32 : i32 to vector<8x1xi32>
    %10 = arith.cmpi slt, %8, %9 : vector<8x1xi32>
    %c0 = arith.constant 0 : index
    %c0_1 = arith.constant 0 : index
    %11 = vector.load %arg2[%c0, %c0_1] : memref<8x128xf32, #tpu.memory_space<vmem>>, vector<8x128xf32>
    %c0_2 = arith.constant 0 : index
    %c0_3 = arith.constant 0 : index
    %12 = vector.load %arg3[%c0_2, %c0_3] : memref<8x128xf32, #tpu.memory_space<vmem>>, vector<8x128xf32>
    %13 = arith.subf %11, %12 : vector<8x128xf32>
    %14 = math.absf %13 : vector<8x128xf32>
    %cst = arith.constant 0.000000e+00 : f32
    %15 = vector.shape_cast %10 : vector<8x1xi1> to vector<8x1xi1>
    %16 = vector.broadcast %15 : vector<8x1xi1> to vector<8x128xi1>
    %17 = vector.broadcast %cst : f32 to vector<8x128xf32>
    %18 = arith.select %16, %14, %17 : vector<8x128xi1>, vector<8x128xf32>
    %19 = vector.shape_cast %18 : vector<8x128xf32> to vector<1x8x128xf32>
    %cst_4 = arith.constant dense<0.000000e+00> : vector<8x128xf32>
    %20 = vector.multi_reduction <add>, %19, %cst_4 [0] : vector<1x8x128xf32> to vector<8x128xf32>
    %c0_5 = arith.constant 0 : index
    %c0_6 = arith.constant 0 : index
    %c0_7 = arith.constant 0 : index
    %21 = vector.load %arg4[%c0_5, %c0_6, %c0_7] : memref<1x8x128xf32, #tpu.memory_space<vmem>>, vector<1x8x128xf32>
    %22 = vector.shape_cast %20 : vector<8x128xf32> to vector<1x8x128xf32>
    %23 = arith.addf %21, %22 : vector<1x8x128xf32>
    %c0_8 = arith.constant 0 : index
    %c0_9 = arith.constant 0 : index
    %c0_10 = arith.constant 0 : index
    %24 = vector.load %arg4[%c0_8, %c0_9, %c0_10] : memref<1x8x128xf32, #tpu.memory_space<vmem>>, vector<1x8x128xf32>
    tpu.vector_store %arg4[%c0_8, %c0_9, %c0_10], %23 {strides = array<i32>} : memref<1x8x128xf32, #tpu.memory_space<vmem>>, vector<1x8x128xf32>,
    return
  }
  func.func @transform_0(%arg0: i32, %arg1: i32) -> (i32, i32) {
    %c1_i32 = arith.constant 1 : i32
    %0 = arith.muli %arg0, %c1_i32 : i32
    %1 = arith.addi %0, %arg1 : i32
    %c1_i32_0 = arith.constant 1 : i32
    %2 = arith.minsi %1, %c1_i32_0 : i32
    %c0_i32 = arith.constant 0 : i32
    %c0_i32_1 = arith.constant 0 : i32
    return %2, %c0_i32 : i32, i32
  }
  func.func @transform_1(%arg0: i32, %arg1: i32) -> (i32, i32) {
    %c1_i32 = arith.constant 1 : i32
    %0 = arith.muli %arg0, %c1_i32 : i32
    %1 = arith.addi %0, %arg1 : i32
    %c1_i32_0 = arith.constant 1 : i32
    %2 = arith.minsi %1, %c1_i32_0 : i32
    %c0_i32 = arith.constant 0 : i32
    %c0_i32_1 = arith.constant 0 : i32
    return %2, %c0_i32 : i32, i32
  }
  func.func @transform_2(%arg0: i32, %arg1: i32) -> (i32, i32, i32) {
    %c0_i32 = arith.constant 0 : i32
    %c0_i32_0 = arith.constant 0 : i32
    %c0_i32_1 = arith.constant 0 : i32
    return %arg0, %c0_i32, %c0_i32_0 : i32, i32, i32
  }
}

</mosaic_0001>

<llo_original>
// kernel: reconstruction_loss.1
$region0: #{reconstruction_loss.1}
  #allocation0 [shape = 'u32[]', space=smem, size = 0x4, offset = 0x4, fixed_abs, tag = 'smem constant byte address 0x4 - core index']
  #allocation1 [shape = 'u32[72,128]{1,0:T(1,128)}', space=vmem, size = 0x9000, scoped, tag = 'internal scratch']
  %s0 = inlined_call_operand.vmem [shape: f32[12,128], index: 0, kind: input, shape index: {}]
  %s1 = inlined_call_operand.vmem [shape: f32[12,128], index: 1, kind: input, shape index: {}]
  %s2 = inlined_call_operand.vmem [shape: f32[2,8,128], index: 2, kind: output, shape index: {}]
  %s3 = sld [smem:[#allocation0]]
  $region45: #{reconstruction_loss.1} parent=0
    _
  %s5 = ssub.s32 1, %s3
  %s6 = scalar_select 0, %s5, %s3
  loop: start=0, step=1, limit=4
  $region2: #{reconstruction_loss.1} parent=0 // loop_pre_header
    _
  $region3: #{reconstruction_loss.1} parent=0 // loop_header
    %s8 = sphi 0, %s12
    %p9 = scmp.ge.s32.totalorder %s8, 4
    %s15 = sphi 0, %s27
    %s16 = sphi 0, %s23
    %s17 = sphi 0, %s15
    %s18 = sphi 0, %s16
    %s19 = sphi 0, %s17
    %s20 = sphi 0, %s18
    %s36 = sphi 0, %s38
    %s39 = sphi 0, %s36
    %s40 = sphi 0, %s39
    %s56 = sphi 0, %s40
    %s68 = sphi 0, %s70
    %s71 = sphi 0, %s68
    %s72 = sphi 0, %s71
    %s88 = sphi 0, %s72
    %s94 = sphi 0, %s96
    %s97 = sphi 0, %s94
    %s98 = sphi 0, %s97
    %s114 = sphi 0, %s98
  $region4: #{reconstruction_loss.1} parent=0 // loop_header_branch
    %11 = sbr.rel (%p9) target = $region8
  $region5: #{reconstruction_loss.1} parent=0 // loop_body
    %s13 = ssub.s32 %s8, 1
    %s14 = ssub.s32 %s8, 2
    %s21 = sadd.s32 1, %s16
    %p22 = scmp.ge.s32.totalorder %s21, 1
    %s23 = scalar_select %p22, 0, %s21
    %s24 = sadd.s32 1, %s15
    %s25 = scalar_select %p22, %s24, %s15
    %p26 = scmp.ge.s32.totalorder %s25, 2
    %s27 = scalar_select %p26, 0, %s25
    %s28 = sadd.s32 %s15, %s16
    %p29 = scmp.lt.s32.totalorder %s28, 1
    %s30 = scalar_select %p29, %s28, 1
    %s31 = sadd.s32 %s27, %s23
    %p32 = scmp.lt.s32.totalorder %s31, 1
    %s33 = scalar_select %p32, %s31, 1
    %s34 = ssub.s32 %s30, %s33
    %p35 = scmp.eq.s32.totalorder %s34, 0
    %s37 = sadd.s32 %s36, 1
    %s38 = scalar_select %p35, %s36, %s37
    %p41 = pneg %p35
    %p42 = scmp.eq.s32.totalorder %s8, 1
    %p43 = por %p41, %p42
    %p44 = scmp.ne.s32.totalorder %s36, %s39
    %p45 = scmp.eq.s32.totalorder %s8, 0
    %p46 = por %p44, %p45
    %p47 = scmp.ne.s32.totalorder %s36, %s39
    %p48 = scmp.eq.s32.totalorder %s13, 1
    %p49 = por %p47, %p48
    %p50 = scmp.ne.s32.totalorder %s39, %s40
    %p51 = scmp.eq.s32.totalorder %s13, 0
    %p52 = por %p50, %p51
    %p53 = scmp.ne.s32.totalorder %s39, %s40
    %p54 = scmp.eq.s32.totalorder %s14, 1
    %p55 = por %p53, %p54
    %p57 = scmp.ne.s32.totalorder %s40, %s56
    %p58 = scmp.eq.s32.totalorder %s14, 0
    %p59 = por %p57, %p58
    %s60 = sadd.s32 %s15, %s16
    %p61 = scmp.lt.s32.totalorder %s60, 1
    %s62 = scalar_select %p61, %s60, 1
    %s63 = sadd.s32 %s27, %s23
    %p64 = scmp.lt.s32.totalorder %s63, 1
    %s65 = scalar_select %p64, %s63, 1
    %s66 = ssub.s32 %s62, %s65
    %p67 = scmp.eq.s32.totalorder %s66, 0
    %s69 = sadd.s32 %s68, 1
    %s70 = scalar_select %p67, %s68, %s69
    %p73 = pneg %p67
    %p74 = scmp.eq.s32.totalorder %s8, 1
    %p75 = por %p73, %p74
    %p76 = scmp.ne.s32.totalorder %s68, %s71
    %p77 = scmp.eq.s32.totalorder %s8, 0
    %p78 = por %p76, %p77
    %p79 = scmp.ne.s32.totalorder %s68, %s71
    %p80 = scmp.eq.s32.totalorder %s13, 1
    %p81 = por %p79, %p80
    %p82 = scmp.ne.s32.totalorder %s71, %s72
    %p83 = scmp.eq.s32.totalorder %s13, 0
    %p84 = por %p82, %p83
    %p85 = scmp.ne.s32.totalorder %s71, %s72
    %p86 = scmp.eq.s32.totalorder %s14, 1
    %p87 = por %p85, %p86
    %p89 = scmp.ne.s32.totalorder %s72, %s88
    %p90 = scmp.eq.s32.totalorder %s14, 0
    %p91 = por %p89, %p90
    %s92 = ssub.s32 %s15, %s27
    %p93 = scmp.eq.s32.totalorder %s92, 0
    %s95 = sadd.s32 %s94, 1
    %s96 = scalar_select %p93, %s94, %s95
    %p99 = pneg %p93
    %p100 = scmp.eq.s32.totalorder %s8, 1
    %p101 = por %p99, %p100
    %p102 = scmp.ne.s32.totalorder %s94, %s97
    %p103 = scmp.eq.s32.totalorder %s8, 0
    %p104 = por %p102, %p103
    %p105 = scmp.ne.s32.totalorder %s94, %s97
    %p106 = scmp.eq.s32.totalorder %s13, 1
    %p107 = por %p105, %p106
    %p108 = scmp.ne.s32.totalorder %s97, %s98
    %p109 = scmp.eq.s32.totalorder %s13, 0
    %p110 = por %p108, %p109
    %p111 = scmp.ne.s32.totalorder %s97, %s98
    %p112 = scmp.eq.s32.totalorder %s14, 1
    %p113 = por %p111, %p112
    %p115 = scmp.ne.s32.totalorder %s98, %s114
    %p116 = scmp.eq.s32.totalorder %s14, 0
    %p117 = por %p115, %p116
    %p118 = scmp.le.s32.totalorder 1, %s8
    %p119 = scmp.lt.s32.totalorder %s8, 3
    %p120 = pnand %p118, %p119
    %p121 = pneg %p120
    // Predicated region
    $region9: #{reconstruction_loss.1} parent=5 // pred_check
      _
    $region10: #{reconstruction_loss.1} parent=5 // pred_check_branch
      %123 = sbr.rel (%p120) target = $region12
    $region11: #{reconstruction_loss.1} parent=5 // pred_region
      %s124 = ssub.s32 %s8, 1
    $region12: #{reconstruction_loss.1} parent=5 // pred_fallthru
      _
    %p125 = scmp.lt.s32.totalorder %s8, 2
    // Predicated region
    $region13: #{reconstruction_loss.1} parent=5 // pred_check
      %p126 = pneg %p125
    $region14: #{reconstruction_loss.1} parent=5 // pred_check_branch
      %128 = sbr.rel (%p126) target = $region16
    $region15: #{reconstruction_loss.1} parent=5 // pred_region
      // Predicated region
      $region17: #{reconstruction_loss.1} parent=15 // pred_check
        %p129 = pneg %p46
      $region18: #{reconstruction_loss.1} parent=15 // pred_check_branch
        %131 = sbr.rel (%p129) target = $region20
      $region19: #{reconstruction_loss.1} parent=15 // pred_region
        %s132 = sadd.s32 %s15, %s16
        %p133 = scmp.lt.s32.totalorder %s132, 1
        %s134 = scalar_select %p133, %s132, 1
        %p135 = scmp.lt.s32.totalorder %s134, 1
        %s136 = scalar_select %p135, %s134, 1
        %s137 = smul.addr %s136, 8
        %s138 = scalar_lea.vmem %s0, %s137
        %s139 = sadd.s32 %s15, %s16
        %p140 = scmp.lt.s32.totalorder %s139, 1
        %s141 = scalar_select %p140, %s139, 1
      $region20: #{reconstruction_loss.1} parent=15 // pred_fallthru
        _
      // Predicated region
      $region21: #{reconstruction_loss.1} parent=15 // pred_check
        %p142 = pneg %p78
      $region22: #{reconstruction_loss.1} parent=15 // pred_check_branch
        %144 = sbr.rel (%p142) target = $region24
      $region23: #{reconstruction_loss.1} parent=15 // pred_region
        %s145 = sadd.s32 %s15, %s16
        %p146 = scmp.lt.s32.totalorder %s145, 1
        %s147 = scalar_select %p146, %s145, 1
        %p148 = scmp.lt.s32.totalorder %s147, 1
        %s149 = scalar_select %p148, %s147, 1
        %s150 = smul.addr %s149, 8
        %s151 = scalar_lea.vmem %s1, %s150
        %s152 = sadd.s32 %s15, %s16
        %p153 = scmp.lt.s32.totalorder %s152, 1
        %s154 = scalar_select %p153, %s152, 1
      $region24: #{reconstruction_loss.1} parent=15 // pred_fallthru
        _
    $region16: #{reconstruction_loss.1} parent=5 // pred_fallthru
      _
    %p155 = scmp.le.s32.totalorder 1, %s8
    %p156 = scmp.lt.s32.totalorder %s8, 3
    %p157 = pnand %p155, %p156
    %p158 = pneg %p157
    // Predicated region
    $region25: #{reconstruction_loss.1} parent=5 // pred_check
      _
    $region26: #{reconstruction_loss.1} parent=5 // pred_check_branch
      %160 = sbr.rel (%p157) target = $region28
    $region27: #{reconstruction_loss.1} parent=5 // pred_region
      %s161 = ssub.s32 %s8, 1
      %s162 = sadd.s32 %s17, %s18
      %p163 = scmp.lt.s32.totalorder %s162, 1
      %s164 = scalar_select %p163, %s162, 1
      %p165 = scmp.lt.s32.totalorder %s164, 1
      %s166 = scalar_select %p165, %s164, 1
      %s167 = smul.addr %s166, 8
      %s168 = scalar_lea.vmem %s0, %s167
      %p169 = pneg %p52
      %p170 = pneg %p49
      %s171 = sadd.s32 %s17, %s18
      %p172 = scmp.lt.s32.totalorder %s171, 1
      %s173 = scalar_select %p172, %s171, 1
      %p174 = scmp.lt.s32.totalorder %s173, 1
      %s175 = scalar_select %p174, %s173, 1
      %s176 = smul.addr %s175, 8
      %s177 = scalar_lea.vmem %s1, %s176
      %p178 = pneg %p84
      %p179 = pneg %p81
      %p180 = pneg %p110
      %p181 = pneg %p107
      %p182 = scmp.lt.s32.totalorder %s17, 1
      %s183 = scalar_select %p182, %s17, 1
      %s184 = smul.addr %s183, 8
      %s185 = scalar_lea.vmem %s2, %s184
      %s186 = sadd.s32 %s17, %s18
      %p187 = scmp.lt.s32.totalorder %s186, 1
      %s188 = scalar_select %p187, %s186, 1
      %p189 = scmp.lt.s32.totalorder %s188, 1
      %s190 = scalar_select %p189, %s188, 1
      %s191 = smul.addr %s190, 8
      %s192 = scalar_lea.vmem %s0, %s191
      %s193 = sadd.s32 %s17, %s18
      %p194 = scmp.lt.s32.totalorder %s193, 1
      %s195 = scalar_select %p194, %s193, 1
      %s196 = sadd.s32 %s17, %s18
      %p197 = scmp.lt.s32.totalorder %s196, 1
      %s198 = scalar_select %p197, %s196, 1
      %p199 = scmp.lt.s32.totalorder %s198, 1
      %s200 = scalar_select %p199, %s198, 1
      %s201 = smul.addr %s200, 8
      %s202 = scalar_lea.vmem %s1, %s201
      %s203 = sadd.s32 %s17, %s18
      %p204 = scmp.lt.s32.totalorder %s203, 1
      %s205 = scalar_select %p204, %s203, 1
      %p206 = scmp.lt.s32.totalorder %s17, 1
      %s207 = scalar_select %p206, %s17, 1
      %s208 = smul.addr %s207, 8
      %s209 = scalar_lea.vmem %s2, %s208
      %p210 = scmp.eq.s32.totalorder %s18, 0
      // Predicated region
      $region29: #{reconstruction_loss.1} parent=27 // pred_check
        %p211 = pneg %p210
      $region30: #{reconstruction_loss.1} parent=27 // pred_check_branch
        %213 = sbr.rel (%p211) target = $region32
      $region31: #{reconstruction_loss.1} parent=27 // pred_region
        %214 = vst [vmem:[%s209] sm:$0xff] 0.0
      $region32: #{reconstruction_loss.1} parent=27 // pred_fallthru
        _
      %s215 = sadd.s32 %s17, %s18
      %s216 = smul.u32 %s215, 8
      %v217 = vlaneseq
      %v218 = vshrl.u32 %v217, 7
      %v219 = vstv %s216
      %v220 = vadd.s32 %v218, %v219
      %vm221 = vcmp.lt.s32.totalorder %v220, 12
      %v222 = vld [vmem:[%s192] sm:$0xff]
      %v223 = vld [vmem:[%s202] sm:$0xff]
      %v224 = vsub.f32 %v222, %v223
      %v225 = vand.u32 2147483647, %v224
      %v226 = vsel %vm221, 1, 0
      %vm227 = vcmp.eq.s32.totalorder %v226, 1
      %v228 = vsel %vm227, %v225, 0.0
      %v229 = vadd.f32 %v228, 0.0
      %v230 = vld [vmem:[%s209] sm:$0xff]
      %v231 = vadd.f32 %v230, %v229
      %232 = vst [vmem:[%s209] sm:$0xff] %v231
      %p233 = scmp.lt.s32.totalorder %s17, 1
      %s234 = scalar_select %p233, %s17, 1
      %s235 = smul.addr %s234, 8
      %s236 = scalar_lea.vmem %s2, %s235
      // Predicated region
      $region33: #{reconstruction_loss.1} parent=27 // pred_check
        %p237 = pneg %p107
      $region34: #{reconstruction_loss.1} parent=27 // pred_check_branch
        %239 = sbr.rel (%p237) target = $region36
      $region35: #{reconstruction_loss.1} parent=27 // pred_region
        _
      $region36: #{reconstruction_loss.1} parent=27 // pred_fallthru
        _
    $region28: #{reconstruction_loss.1} parent=5 // pred_fallthru
      _
    %p240 = scmp.le.s32.totalorder 2, %s8
    // Predicated region
    $region37: #{reconstruction_loss.1} parent=5 // pred_check
      %p241 = pneg %p240
    $region38: #{reconstruction_loss.1} parent=5 // pred_check_branch
      %243 = sbr.rel (%p241) target = $region40
    $region39: #{reconstruction_loss.1} parent=5 // pred_region
      %s244 = ssub.s32 %s8, 2
      // Predicated region
      $region41: #{reconstruction_loss.1} parent=39 // pred_check
        %p245 = pneg %p113
      $region42: #{reconstruction_loss.1} parent=39 // pred_check_branch
        %247 = sbr.rel (%p245) target = $region44
      $region43: #{reconstruction_loss.1} parent=39 // pred_region
        %p248 = scmp.lt.s32.totalorder %s19, 1
        %s249 = scalar_select %p248, %s19, 1
        %s250 = smul.addr %s249, 8
        %s251 = scalar_lea.vmem %s2, %s250
      $region44: #{reconstruction_loss.1} parent=39 // pred_fallthru
        _
    $region40: #{reconstruction_loss.1} parent=5 // pred_fallthru
      _
  $region6: #{reconstruction_loss.1} parent=0 // loop_footer
    %s12 = sadd.s32 1, %s8
  $region7: #{reconstruction_loss.1} parent=0 // loop_footer_branch
    %7 = sbr.rel target = $region3
  $region8: #{reconstruction_loss.1} parent=0 // loop_exit
    _

</llo_original>
